<compile_context>
chip_gen: v6e
topology: v6e:2x2x1
jax: 0.10.0
libtpu: 0.0.40
codegen_flags: <defaults>
</compile_context>

<pallas_src>
import functools

import jax
import jax.numpy as jnp
import numpy as np
from jax.experimental import pallas as pl
from jax.experimental.pallas import tpu as pltpu


def _lstm_kernel(x2d_ref, w_ref, state0_ref, out_ref, gx_sc,
                 *, seq_len: int, batch: int, hidden: int):
    """Single-invocation LSTM: batched input projection + unrolled serial recurrence.

    x2d_ref:    (T*B, D)      time-major flattened inputs
    w_ref:      (2D + 8, 4D)  packed [W_ih^T ; W_hh^T ; bias row (padded to 8 sublanes)]
    state0_ref: (2B, D)       packed [h0 ; c0]
    out_ref:    (T*B, D)      time-major flattened outputs
    gx_sc:      (T*B, 4D)     f32 scratch for the hoisted input projection
    """
    T, B, H = seq_len, batch, hidden

    # ---- Loop-invariant loads (hoisted; all slices are static & sublane-aligned) ----
    w_ih = w_ref[0:H, :]                               # (H, 4H)
    w_hh = w_ref[H:2 * H, :]                           # (H, 4H)
    bias = w_ref[pl.ds(2 * H, 1), :]                   # (1, 4H) broadcast row
    h0 = state0_ref[0:B, :].astype(jnp.float32)        # (B, H)
    c0 = state0_ref[B:2 * B, :].astype(jnp.float32)    # (B, H)

    lane = jax.lax.broadcasted_iota(jnp.int32, (B, 4 * H), 1)
    g_mask = (lane >= 2 * H) & (lane < 3 * H)          # tanh lanes (g gate)

    # ---- Hoisted, time-independent input projection: one batched MXU matmul ----
    # gates_x[t*B + b, :] = x[t, b, :] @ W_ih^T + (b_ih + b_hh)
    gx_sc[...] = (jnp.dot(x2d_ref[...].astype(jnp.float32), w_ih,
                          preferred_element_type=jnp.float32)
                  + bias)                              # (T*B, 4H)

    # ---- Serial recurrence: only h @ W_hh stays on the critical path ----
    def step(t, carry):
        h, c = carry
        row = pl.multiple_of(t * B, B)                 # sublane-aligned offset
        gates = gx_sc[pl.ds(row, B), :] + jnp.dot(
            h, w_hh, preferred_element_type=jnp.float32)           # (B, 4H)

        # Whole-vreg activations: 1 sigmoid + 1 tanh over the full (B, 4H) tile,
        # g-gate lanes selected with the precomputed lane mask (no sub-vreg EUP calls).
        act = jnp.where(g_mask, jnp.tanh(gates), jax.nn.sigmoid(gates))

        i_g = act[:, 0 * H:1 * H]
        f_g = act[:, 1 * H:2 * H]
        g_g = act[:, 2 * H:3 * H]
        o_g = act[:, 3 * H:4 * H]

        c_new = f_g * c + i_g * g_g
        h_new = o_g * jnp.tanh(c_new)

        out_ref[pl.ds(row, B), :] = h_new.astype(out_ref.dtype)
        return (h_new, c_new)

    # Fully unrolled in-kernel time loop (LLO scheduler sees the whole recurrence).
    jax.lax.fori_loop(0, T, step, (h0, c0), unroll=True)


def lstm_decoder_forward(x_future, encoder_output_layer, encoder_output_net,
                         hx1, hx2, params):
    """Pallas implementation of LSTMDecoderModule.forward (ts_skip_size=1, eval mode).

    x_future: (B, T, D) batch-first, like PyTorch.
    hx1, hx2: (1, B, D) initial hidden / cell state.
    encoder_output_layer / encoder_output_net: unused by this decoder module.
    """
    del encoder_output_layer, encoder_output_net
    B, T, D = x_future.shape

    # Parameter prep (one-off, off the recurrence critical path):
    # PyTorch weight_*_l0 is (4D, D) -> transpose to (D, 4D); fold the two biases; pack
    # everything into a single slab so the kernel sees one parameter DMA.
    w_ih_t = params["weight_ih_l0"].T                                  # (D, 4D)
    w_hh_t = params["weight_hh_l0"].T                                  # (D, 4D)
    bias = (params["bias_ih_l0"] + params["bias_hh_l0"]).reshape(1, 4 * D)
    w_all = jnp.concatenate(
        [w_ih_t, w_hh_t, jnp.broadcast_to(bias, (8, 4 * D))], axis=0)  # (2D + 8, 4D)

    x2d = jnp.transpose(x_future, (1, 0, 2)).reshape(T * B, D)         # time-major (T*B, D)
    state0 = jnp.concatenate([hx1[0], hx2[0]], axis=0)                 # (2B, D)  [h0 ; c0]

    kernel = functools.partial(_lstm_kernel, seq_len=T, batch=B, hidden=D)

    vmem = pltpu.MemorySpace.VMEM
    out2d = pl.pallas_call(
        kernel,
        out_shape=jax.ShapeDtypeStruct((T * B, D), x_future.dtype),
        in_specs=[
            pl.BlockSpec(memory_space=vmem),          # x2d    (T*B, D)
            pl.BlockSpec(memory_space=vmem),          # w_all  (2D+8, 4D)
            pl.BlockSpec(memory_space=vmem),          # state0 (2B, D)
        ],
        out_specs=pl.BlockSpec(memory_space=vmem),    # (T*B, D), one writeback DMA
        scratch_shapes=[
            pltpu.VMEM((T * B, 4 * D), jnp.float32),  # precomputed input-projection gates
        ],
    )(x2d, w_all, state0)

    # Dropout is identity at inference time (module's self.norm is unused in forward).
    return jnp.transpose(out2d.reshape(T, B, D), (1, 0, 2))            # back to (B, T, D)


def _reference_lstm(x_future, hx1, hx2, params):
    """Pure-JAX reference matching torch.nn.LSTM (gate order i, f, g, o)."""
    w_ih = params["weight_ih_l0"]
    w_hh = params["weight_hh_l0"]
    b = params["bias_ih_l0"] + params["bias_hh_l0"]
    D = x_future.shape[-1]

    def step(carry, x_t):
        h, c = carry
        gates = x_t @ w_ih.T + h @ w_hh.T + b
        i = jax.nn.sigmoid(gates[:, 0 * D:1 * D])
        f = jax.nn.sigmoid(gates[:, 1 * D:2 * D])
        g = jnp.tanh(gates[:, 2 * D:3 * D])
        o = jax.nn.sigmoid(gates[:, 3 * D:4 * D])
        c = f * c + i * g
        h = o * jnp.tanh(c)
        return (h, c), h

    x_tm = jnp.transpose(x_future, (1, 0, 2))
    (_, _), ys = jax.lax.scan(step, (hx1[0], hx2[0]), x_tm)
    return jnp.transpose(ys, (1, 0, 2))


if __name__ == "__main__":
    B, T, D = 8, 8, 32        # batch, seq len, d_model
    key = jax.random.PRNGKey(0)
    k_x, k_h, k_c, k1, k2, k3, k4 = jax.random.split(key, 7)

    # Deterministic parameter init (uniform(-1/sqrt(D), 1/sqrt(D)) like PyTorch LSTM).
    bound = 1.0 / np.sqrt(D)
    params = {
        "weight_ih_l0": jax.random.uniform(k1, (4 * D, D), jnp.float32, -bound, bound),
        "weight_hh_l0": jax.random.uniform(k2, (4 * D, D), jnp.float32, -bound, bound),
        "bias_ih_l0":   jax.random.uniform(k3, (4 * D,),   jnp.float32, -bound, bound),
        "bias_hh_l0":   jax.random.uniform(k4, (4 * D,),   jnp.float32, -bound, bound),
    }

    x_future = jax.random.normal(k_x, (B, T, D), jnp.float32)
    hx1 = jax.random.normal(k_h, (1, B, D), jnp.float32)    # h0
    hx2 = jax.random.normal(k_c, (1, B, D), jnp.float32)    # c0
    enc_layer = jnp.zeros((B, T, D), jnp.float32)            # unused by this module
    enc_net = jnp.zeros((B, T, D), jnp.float32)              # unused by this module

    out = lstm_decoder_forward(x_future, enc_layer, enc_net, hx1, hx2, params)
    out = jax.block_until_ready(out)

    ref = jax.block_until_ready(_reference_lstm(x_future, hx1, hx2, params))
    np.testing.assert_allclose(np.asarray(out), np.asarray(ref), rtol=1e-5, atol=1e-5)

    # TODO(synk): training-mode nn.Dropout (stochastic mask) omitted; inference semantics used.
    # TODO(synk): bf16-weight MXU path skipped to keep exact f32 parity at this tiny D; at
    #             larger D cast W_ih/W_hh to bf16 (and loosen test tolerance to ~1e-2).
    print("KERNEL_OK")
</pallas_src>

<mosaic_0001>
module attributes {stable_mosaic.version = 11 : i64} {
  func.func @_lstm_kernel(%arg0: memref<64x32xf32, #tpu.memory_space<vmem>>, %arg1: memref<72x128xf32, #tpu.memory_space<vmem>>, %arg2: memref<16x32xf32, #tpu.memory_space<vmem>>, %arg3: memref<64x32xf32, #tpu.memory_space<vmem>>, %arg4: memref<64x128xf32, #tpu.memory_space<vmem>>) attributes {dimension_semantics = [], scalar_prefetch = 0 : i64, scratch_operands = 1 : i64, tpu.core_type = #tpu.core_type<tc>} {
    %c0 = arith.constant 0 : index
    %c0_0 = arith.constant 0 : index
    %0 = vector.load %arg1[%c0, %c0_0] : memref<72x128xf32, #tpu.memory_space<vmem>>, vector<32x128xf32>
    %c32 = arith.constant 32 : index
    %c0_1 = arith.constant 0 : index
    %1 = vector.load %arg1[%c32, %c0_1] : memref<72x128xf32, #tpu.memory_space<vmem>>, vector<32x128xf32>
    %c64 = arith.constant 64 : index
    %c0_2 = arith.constant 0 : index
    %2 = vector.load %arg1[%c64, %c0_2] : memref<72x128xf32, #tpu.memory_space<vmem>>, vector<1x128xf32>
    %c0_3 = arith.constant 0 : index
    %c0_4 = arith.constant 0 : index
    %3 = vector.load %arg2[%c0_3, %c0_4] : memref<16x32xf32, #tpu.memory_space<vmem>>, vector<8x32xf32>
    %c8 = arith.constant 8 : index
    %c0_5 = arith.constant 0 : index
    %4 = vector.load %arg2[%c8, %c0_5] : memref<16x32xf32, #tpu.memory_space<vmem>>, vector<8x32xf32>
    %5 = tpu.iota {dimensions = array<i32: 1>} : vector<8x128xi32>
    %c64_i32 = arith.constant 64 : i32
    %6 = vector.broadcast %c64_i32 : i32 to vector<8x128xi32>
    %7 = arith.cmpi sge, %5, %6 : vector<8x128xi32>
    %c96_i32 = arith.constant 96 : i32
    %8 = vector.broadcast %c96_i32 : i32 to vector<8x128xi32>
    %9 = arith.cmpi slt, %5, %8 : vector<8x128xi32>
    %10 = arith.andi %7, %9 : vector<8x128xi1>
    %c0_6 = arith.constant 0 : index
    %c0_7 = arith.constant 0 : index
    %11 = vector.load %arg0[%c0_6, %c0_7] : memref<64x32xf32, #tpu.memory_space<vmem>>, vector<64x32xf32>
    %cst = arith.constant dense<0.000000e+00> : vector<64x128xf32>
    %12 = tpu.matmul %11, %0, %cst {dimension_numbers = #tpu.dot_dimension_numbers<[1], [0], [0], [1], [0, 0, 1, 1], [], []>} : vector<64x32xf32>, vector<32x128xf32>, vector<64x128xf32> -> vector<64x128xf32>
    %13 = vector.broadcast %2 : vector<1x128xf32> to vector<64x128xf32>
    %14 = arith.addf %12, %13 : vector<64x128xf32>
    %c0_8 = arith.constant 0 : index
    %c0_9 = arith.constant 0 : index
    %15 = vector.load %arg4[%c0_8, %c0_9] : memref<64x128xf32, #tpu.memory_space<vmem>>, vector<64x128xf32>
    tpu.vector_store %arg4[%c0_8, %c0_9], %14 {strides = array<i32>} : memref<64x128xf32, #tpu.memory_space<vmem>>, vector<64x128xf32>,
    %c0_i32 = arith.constant 0 : i32
    %c8_i32 = arith.constant 8 : i32
    %16 = arith.muli %c0_i32, %c8_i32 : i32
    %17 = tpu.assume_multiple %16, 8 : i32
    %18 = arith.index_cast %17 : i32 to index
    %c0_10 = arith.constant 0 : index
    %19 = vector.load %arg4[%18, %c0_10] : memref<64x128xf32, #tpu.memory_space<vmem>>, vector<8x128xf32>
    %cst_11 = arith.constant dense<0.000000e+00> : vector<8x128xf32>
    %20 = tpu.matmul %3, %1, %cst_11 {dimension_numbers = #tpu.dot_dimension_numbers<[1], [0], [0], [1], [0, 0, 1, 1], [], []>} : vector<8x32xf32>, vector<32x128xf32>, vector<8x128xf32> -> vector<8x128xf32>
    %21 = arith.addf %19, %20 : vector<8x128xf32>
    %22 = math.tanh %21 : vector<8x128xf32>
    %23 = arith.negf %21 : vector<8x128xf32>
    %24 = math.exp %23 : vector<8x128xf32>
    %cst_12 = arith.constant 1.000000e+00 : f32
    %25 = vector.broadcast %cst_12 : f32 to vector<8x128xf32>
    %26 = arith.addf %25, %24 : vector<8x128xf32>
    %27 = arith.divf %25, %26 : vector<8x128xf32>
    %28 = arith.select %10, %22, %27 : vector<8x128xi1>, vector<8x128xf32>
    %29 = vector.extract_strided_slice %28 {offsets = [0, 0], sizes = [8, 32], strides = [1, 1]} : vector<8x128xf32> to vector<8x32xf32>
    %30 = vector.extract_strided_slice %28 {offsets = [0, 32], sizes = [8, 32], strides = [1, 1]} : vector<8x128xf32> to vector<8x32xf32>
    %31 = vector.extract_strided_slice %28 {offsets = [0, 64], sizes = [8, 32], strides = [1, 1]} : vector<8x128xf32> to vector<8x32xf32>
    %32 = vector.extract_strided_slice %28 {offsets = [0, 96], sizes = [8, 32], strides = [1, 1]} : vector<8x128xf32> to vector<8x32xf32>
    %33 = arith.mulf %30, %4 : vector<8x32xf32>
    %34 = arith.mulf %29, %31 : vector<8x32xf32>
    %35 = arith.addf %33, %34 : vector<8x32xf32>
    %36 = math.tanh %35 : vector<8x32xf32>
    %37 = arith.mulf %32, %36 : vector<8x32xf32>
    %38 = arith.index_cast %17 : i32 to index
    %c0_13 = arith.constant 0 : index
    %39 = vector.load %arg3[%38, %c0_13] : memref<64x32xf32, #tpu.memory_space<vmem>>, vector<8x32xf32>
    tpu.vector_store %arg3[%38, %c0_13], %37 {strides = array<i32>} : memref<64x32xf32, #tpu.memory_space<vmem>>, vector<8x32xf32>,
    %c1_i32 = arith.constant 1 : i32
    %c8_i32_14 = arith.constant 8 : i32
    %40 = arith.muli %c1_i32, %c8_i32_14 : i32
    %41 = tpu.assume_multiple %40, 8 : i32
    %42 = arith.index_cast %41 : i32 to index
    %c0_15 = arith.constant 0 : index
    %43 = vector.load %arg4[%42, %c0_15] : memref<64x128xf32, #tpu.memory_space<vmem>>, vector<8x128xf32>
    %cst_16 = arith.constant dense<0.000000e+00> : vector<8x128xf32>
    %44 = tpu.matmul %37, %1, %cst_16 {dimension_numbers = #tpu.dot_dimension_numbers<[1], [0], [0], [1], [0, 0, 1, 1], [], []>} : vector<8x32xf32>, vector<32x128xf32>, vector<8x128xf32> -> vector<8x128xf32>
    %45 = arith.addf %43, %44 : vector<8x128xf32>
    %46 = math.tanh %45 : vector<8x128xf32>
    %47 = arith.negf %45 : vector<8x128xf32>
    %48 = math.exp %47 : vector<8x128xf32>
    %cst_17 = arith.constant 1.000000e+00 : f32
    %49 = vector.broadcast %cst_17 : f32 to vector<8x128xf32>
    %50 = arith.addf %49, %48 : vector<8x128xf32>
    %51 = arith.divf %49, %50 : vector<8x128xf32>
    %52 = arith.select %10, %46, %51 : vector<8x128xi1>, vector<8x128xf32>
    %53 = vector.extract_strided_slice %52 {offsets = [0, 0], sizes = [8, 32], strides = [1, 1]} : vector<8x128xf32> to vector<8x32xf32>
    %54 = vector.extract_strided_slice %52 {offsets = [0, 32], sizes = [8, 32], strides = [1, 1]} : vector<8x128xf32> to vector<8x32xf32>
    %55 = vector.extract_strided_slice %52 {offsets = [0, 64], sizes = [8, 32], strides = [1, 1]} : vector<8x128xf32> to vector<8x32xf32>
    %56 = vector.extract_strided_slice %52 {offsets = [0, 96], sizes = [8, 32], strides = [1, 1]} : vector<8x128xf32> to vector<8x32xf32>
    %57 = arith.mulf %54, %35 : vector<8x32xf32>
    %58 = arith.mulf %53, %55 : vector<8x32xf32>
    %59 = arith.addf %57, %58 : vector<8x32xf32>
    %60 = math.tanh %59 : vector<8x32xf32>
    %61 = arith.mulf %56, %60 : vector<8x32xf32>
    %62 = arith.index_cast %41 : i32 to index
    %c0_18 = arith.constant 0 : index
    %63 = vector.load %arg3[%62, %c0_18] : memref<64x32xf32, #tpu.memory_space<vmem>>, vector<8x32xf32>
    tpu.vector_store %arg3[%62, %c0_18], %61 {strides = array<i32>} : memref<64x32xf32, #tpu.memory_space<vmem>>, vector<8x32xf32>,
    %c2_i32 = arith.constant 2 : i32
    %c8_i32_19 = arith.constant 8 : i32
    %64 = arith.muli %c2_i32, %c8_i32_19 : i32
    %65 = tpu.assume_multiple %64, 8 : i32
    %66 = arith.index_cast %65 : i32 to index
    %c0_20 = arith.constant 0 : index
    %67 = vector.load %arg4[%66, %c0_20] : memref<64x128xf32, #tpu.memory_space<vmem>>, vector<8x128xf32>
    %cst_21 = arith.constant dense<0.000000e+00> : vector<8x128xf32>
    %68 = tpu.matmul %61, %1, %cst_21 {dimension_numbers = #tpu.dot_dimension_numbers<[1], [0], [0], [1], [0, 0, 1, 1], [], []>} : vector<8x32xf32>, vector<32x128xf32>, vector<8x128xf32> -> vector<8x128xf32>
    %69 = arith.addf %67, %68 : vector<8x128xf32>
    %70 = math.tanh %69 : vector<8x128xf32>
    %71 = arith.negf %69 : vector<8x128xf32>
    %72 = math.exp %71 : vector<8x128xf32>
    %cst_22 = arith.constant 1.000000e+00 : f32
    %73 = vector.broadcast %cst_22 : f32 to vector<8x128xf32>
    %74 = arith.addf %73, %72 : vector<8x128xf32>
    %75 = arith.divf %73, %74 : vector<8x128xf32>
    %76 = arith.select %10, %70, %75 : vector<8x128xi1>, vector<8x128xf32>
    %77 = vector.extract_strided_slice %76 {offsets = [0, 0], sizes = [8, 32], strides = [1, 1]} : vector<8x128xf32> to vector<8x32xf32>
    %78 = vector.extract_strided_slice %76 {offsets = [0, 32], sizes = [8, 32], strides = [1, 1]} : vector<8x128xf32> to vector<8x32xf32>
    %79 = vector.extract_strided_slice %76 {offsets = [0, 64], sizes = [8, 32], strides = [1, 1]} : vector<8x128xf32> to vector<8x32xf32>
    %80 = vector.extract_strided_slice %76 {offsets = [0, 96], sizes = [8, 32], strides = [1, 1]} : vector<8x128xf32> to vector<8x32xf32>
    %81 = arith.mulf %78, %59 : vector<8x32xf32>
    %82 = arith.mulf %77, %79 : vector<8x32xf32>
    %83 = arith.addf %81, %82 : vector<8x32xf32>
    %84 = math.tanh %83 : vector<8x32xf32>
    %85 = arith.mulf %80, %84 : vector<8x32xf32>
    %86 = arith.index_cast %65 : i32 to index
    %c0_23 = arith.constant 0 : index
    %87 = vector.load %arg3[%86, %c0_23] : memref<64x32xf32, #tpu.memory_space<vmem>>, vector<8x32xf32>
    tpu.vector_store %arg3[%86, %c0_23], %85 {strides = array<i32>} : memref<64x32xf32, #tpu.memory_space<vmem>>, vector<8x32xf32>,
    %c3_i32 = arith.constant 3 : i32
    %c8_i32_24 = arith.constant 8 : i32
    %88 = arith.muli %c3_i32, %c8_i32_24 : i32
    %89 = tpu.assume_multiple %88, 8 : i32
    %90 = arith.index_cast %89 : i32 to index
    %c0_25 = arith.constant 0 : index
    %91 = vector.load %arg4[%90, %c0_25] : memref<64x128xf32, #tpu.memory_space<vmem>>, vector<8x128xf32>
    %cst_26 = arith.constant dense<0.000000e+00> : vector<8x128xf32>
    %92 = tpu.matmul %85, %1, %cst_26 {dimension_numbers = #tpu.dot_dimension_numbers<[1], [0], [0], [1], [0, 0, 1, 1], [], []>} : vector<8x32xf32>, vector<32x128xf32>, vector<8x128xf32> -> vector<8x128xf32>
    %93 = arith.addf %91, %92 : vector<8x128xf32>
    %94 = math.tanh %93 : vector<8x128xf32>
    %95 = arith.negf %93 : vector<8x128xf32>
    %96 = math.exp %95 : vector<8x128xf32>
    %cst_27 = arith.constant 1.000000e+00 : f32
    %97 = vector.broadcast %cst_27 : f32 to vector<8x128xf32>
    %98 = arith.addf %97, %96 : vector<8x128xf32>
    %99 = arith.divf %97, %98 : vector<8x128xf32>
    %100 = arith.select %10, %94, %99 : vector<8x128xi1>, vector<8x128xf32>
    %101 = vector.extract_strided_slice %100 {offsets = [0, 0], sizes = [8, 32], strides = [1, 1]} : vector<8x128xf32> to vector<8x32xf32>
    %102 = vector.extract_strided_slice %100 {offsets = [0, 32], sizes = [8, 32], strides = [1, 1]} : vector<8x128xf32> to vector<8x32xf32>
    %103 = vector.extract_strided_slice %100 {offsets = [0, 64], sizes = [8, 32], strides = [1, 1]} : vector<8x128xf32> to vector<8x32xf32>
    %104 = vector.extract_strided_slice %100 {offsets = [0, 96], sizes = [8, 32], strides = [1, 1]} : vector<8x128xf32> to vector<8x32xf32>
    %105 = arith.mulf %102, %83 : vector<8x32xf32>
    %106 = arith.mulf %101, %103 : vector<8x32xf32>
    %107 = arith.addf %105, %106 : vector<8x32xf32>
    %108 = math.tanh %107 : vector<8x32xf32>
    %109 = arith.mulf %104, %108 : vector<8x32xf32>
    %110 = arith.index_cast %89 : i32 to index
    %c0_28 = arith.constant 0 : index
    %111 = vector.load %arg3[%110, %c0_28] : memref<64x32xf32, #tpu.memory_space<vmem>>, vector<8x32xf32>
    tpu.vector_store %arg3[%110, %c0_28], %109 {strides = array<i32>} : memref<64x32xf32, #tpu.memory_space<vmem>>, vector<8x32xf32>,
    %c4_i32 = arith.constant 4 : i32
    %c8_i32_29 = arith.constant 8 : i32
    %112 = arith.muli %c4_i32, %c8_i32_29 : i32
    %113 = tpu.assume_multiple %112, 8 : i32
    %114 = arith.index_cast %113 : i32 to index
    %c0_30 = arith.constant 0 : index
    %115 = vector.load %arg4[%114, %c0_30] : memref<64x128xf32, #tpu.memory_space<vmem>>, vector<8x128xf32>
    %cst_31 = arith.constant dense<0.000000e+00> : vector<8x128xf32>
    %116 = tpu.matmul %109, %1, %cst_31 {dimension_numbers = #tpu.dot_dimension_numbers<[1], [0], [0], [1], [0, 0, 1, 1], [], []>} : vector<8x32xf32>, vector<32x128xf32>, vector<8x128xf32> -> vector<8x128xf32>
    %117 = arith.addf %115, %116 : vector<8x128xf32>
    %118 = math.tanh %117 : vector<8x128xf32>
    %119 = arith.negf %117 : vector<8x128xf32>
    %120 = math.exp %119 : vector<8x128xf32>
    %cst_32 = arith.constant 1.000000e+00 : f32
    %121 = vector.broadcast %cst_32 : f32 to vector<8x128xf32>
    %122 = arith.addf %121, %120 : vector<8x128xf32>
    %123 = arith.divf %121, %122 : vector<8x128xf32>
    %124 = arith.select %10, %118, %123 : vector<8x128xi1>, vector<8x128xf32>
    %125 = vector.extract_strided_slice %124 {offsets = [0, 0], sizes = [8, 32], strides = [1, 1]} : vector<8x128xf32> to vector<8x32xf32>
    %126 = vector.extract_strided_slice %124 {offsets = [0, 32], sizes = [8, 32], strides = [1, 1]} : vector<8x128xf32> to vector<8x32xf32>
    %127 = vector.extract_strided_slice %124 {offsets = [0, 64], sizes = [8, 32], strides = [1, 1]} : vector<8x128xf32> to vector<8x32xf32>
    %128 = vector.extract_strided_slice %124 {offsets = [0, 96], sizes = [8, 32], strides = [1, 1]} : vector<8x128xf32> to vector<8x32xf32>
    %129 = arith.mulf %126, %107 : vector<8x32xf32>
    %130 = arith.mulf %125, %127 : vector<8x32xf32>
    %131 = arith.addf %129, %130 : vector<8x32xf32>
    %132 = math.tanh %131 : vector<8x32xf32>
    %133 = arith.mulf %128, %132 : vector<8x32xf32>
    %134 = arith.index_cast %113 : i32 to index
    %c0_33 = arith.constant 0 : index
    %135 = vector.load %arg3[%134, %c0_33] : memref<64x32xf32, #tpu.memory_space<vmem>>, vector<8x32xf32>
    tpu.vector_store %arg3[%134, %c0_33], %133 {strides = array<i32>} : memref<64x32xf32, #tpu.memory_space<vmem>>, vector<8x32xf32>,
    %c5_i32 = arith.constant 5 : i32
    %c8_i32_34 = arith.constant 8 : i32
    %136 = arith.muli %c5_i32, %c8_i32_34 : i32
    %137 = tpu.assume_multiple %136, 8 : i32
    %138 = arith.index_cast %137 : i32 to index
    %c0_35 = arith.constant 0 : index
    %139 = vector.load %arg4[%138, %c0_35] : memref<64x128xf32, #tpu.memory_space<vmem>>, vector<8x128xf32>
    %cst_36 = arith.constant dense<0.000000e+00> : vector<8x128xf32>
    %140 = tpu.matmul %133, %1, %cst_36 {dimension_numbers = #tpu.dot_dimension_numbers<[1], [0], [0], [1], [0, 0, 1, 1], [], []>} : vector<8x32xf32>, vector<32x128xf32>, vector<8x128xf32> -> vector<8x128xf32>
    %141 = arith.addf %139, %140 : vector<8x128xf32>
    %142 = math.tanh %141 : vector<8x128xf32>
    %143 = arith.negf %141 : vector<8x128xf32>
    %144 = math.exp %143 : vector<8x128xf32>
    %cst_37 = arith.constant 1.000000e+00 : f32
    %145 = vector.broadcast %cst_37 : f32 to vector<8x128xf32>
    %146 = arith.addf %145, %144 : vector<8x128xf32>
    %147 = arith.divf %145, %146 : vector<8x128xf32>
    %148 = arith.select %10, %142, %147 : vector<8x128xi1>, vector<8x128xf32>
    %149 = vector.extract_strided_slice %148 {offsets = [0, 0], sizes = [8, 32], strides = [1, 1]} : vector<8x128xf32> to vector<8x32xf32>
    %150 = vector.extract_strided_slice %148 {offsets = [0, 32], sizes = [8, 32], strides = [1, 1]} : vector<8x128xf32> to vector<8x32xf32>
    %151 = vector.extract_strided_slice %148 {offsets = [0, 64], sizes = [8, 32], strides = [1, 1]} : vector<8x128xf32> to vector<8x32xf32>
    %152 = vector.extract_strided_slice %148 {offsets = [0, 96], sizes = [8, 32], strides = [1, 1]} : vector<8x128xf32> to vector<8x32xf32>
    %153 = arith.mulf %150, %131 : vector<8x32xf32>
    %154 = arith.mulf %149, %151 : vector<8x32xf32>
    %155 = arith.addf %153, %154 : vector<8x32xf32>
    %156 = math.tanh %155 : vector<8x32xf32>
    %157 = arith.mulf %152, %156 : vector<8x32xf32>
    %158 = arith.index_cast %137 : i32 to index
    %c0_38 = arith.constant 0 : index
    %159 = vector.load %arg3[%158, %c0_38] : memref<64x32xf32, #tpu.memory_space<vmem>>, vector<8x32xf32>
    tpu.vector_store %arg3[%158, %c0_38], %157 {strides = array<i32>} : memref<64x32xf32, #tpu.memory_space<vmem>>, vector<8x32xf32>,
    %c6_i32 = arith.constant 6 : i32
    %c8_i32_39 = arith.constant 8 : i32
    %160 = arith.muli %c6_i32, %c8_i32_39 : i32
    %161 = tpu.assume_multiple %160, 8 : i32
    %162 = arith.index_cast %161 : i32 to index
    %c0_40 = arith.constant 0 : index
    %163 = vector.load %arg4[%162, %c0_40] : memref<64x128xf32, #tpu.memory_space<vmem>>, vector<8x128xf32>
    %cst_41 = arith.constant dense<0.000000e+00> : vector<8x128xf32>
    %164 = tpu.matmul %157, %1, %cst_41 {dimension_numbers = #tpu.dot_dimension_numbers<[1], [0], [0], [1], [0, 0, 1, 1], [], []>} : vector<8x32xf32>, vector<32x128xf32>, vector<8x128xf32> -> vector<8x128xf32>
    %165 = arith.addf %163, %164 : vector<8x128xf32>
    %166 = math.tanh %165 : vector<8x128xf32>
    %167 = arith.negf %165 : vector<8x128xf32>
    %168 = math.exp %167 : vector<8x128xf32>
    %cst_42 = arith.constant 1.000000e+00 : f32
    %169 = vector.broadcast %cst_42 : f32 to vector<8x128xf32>
    %170 = arith.addf %169, %168 : vector<8x128xf32>
    %171 = arith.divf %169, %170 : vector<8x128xf32>
    %172 = arith.select %10, %166, %171 : vector<8x128xi1>, vector<8x128xf32>
    %173 = vector.extract_strided_slice %172 {offsets = [0, 0], sizes = [8, 32], strides = [1, 1]} : vector<8x128xf32> to vector<8x32xf32>
    %174 = vector.extract_strided_slice %172 {offsets = [0, 32], sizes = [8, 32], strides = [1, 1]} : vector<8x128xf32> to vector<8x32xf32>
    %175 = vector.extract_strided_slice %172 {offsets = [0, 64], sizes = [8, 32], strides = [1, 1]} : vector<8x128xf32> to vector<8x32xf32>
    %176 = vector.extract_strided_slice %172 {offsets = [0, 96], sizes = [8, 32], strides = [1, 1]} : vector<8x128xf32> to vector<8x32xf32>
    %177 = arith.mulf %174, %155 : vector<8x32xf32>
    %178 = arith.mulf %173, %175 : vector<8x32xf32>
    %179 = arith.addf %177, %178 : vector<8x32xf32>
    %180 = math.tanh %179 : vector<8x32xf32>
    %181 = arith.mulf %176, %180 : vector<8x32xf32>
    %182 = arith.index_cast %161 : i32 to index
    %c0_43 = arith.constant 0 : index
    %183 = vector.load %arg3[%182, %c0_43] : memref<64x32xf32, #tpu.memory_space<vmem>>, vector<8x32xf32>
    tpu.vector_store %arg3[%182, %c0_43], %181 {strides = array<i32>} : memref<64x32xf32, #tpu.memory_space<vmem>>, vector<8x32xf32>,
    %c7_i32 = arith.constant 7 : i32
    %c8_i32_44 = arith.constant 8 : i32
    %184 = arith.muli %c7_i32, %c8_i32_44 : i32
    %185 = tpu.assume_multiple %184, 8 : i32
    %186 = arith.index_cast %185 : i32 to index
    %c0_45 = arith.constant 0 : index
    %187 = vector.load %arg4[%186, %c0_45] : memref<64x128xf32, #tpu.memory_space<vmem>>, vector<8x128xf32>
    %cst_46 = arith.constant dense<0.000000e+00> : vector<8x128xf32>
    %188 = tpu.matmul %181, %1, %cst_46 {dimension_numbers = #tpu.dot_dimension_numbers<[1], [0], [0], [1], [0, 0, 1, 1], [], []>} : vector<8x32xf32>, vector<32x128xf32>, vector<8x128xf32> -> vector<8x128xf32>
    %189 = arith.addf %187, %188 : vector<8x128xf32>
    %190 = math.tanh %189 : vector<8x128xf32>
    %191 = arith.negf %189 : vector<8x128xf32>
    %192 = math.exp %191 : vector<8x128xf32>
    %cst_47 = arith.constant 1.000000e+00 : f32
    %193 = vector.broadcast %cst_47 : f32 to vector<8x128xf32>
    %194 = arith.addf %193, %192 : vector<8x128xf32>
    %195 = arith.divf %193, %194 : vector<8x128xf32>
    %196 = arith.select %10, %190, %195 : vector<8x128xi1>, vector<8x128xf32>
    %197 = vector.extract_strided_slice %196 {offsets = [0, 0], sizes = [8, 32], strides = [1, 1]} : vector<8x128xf32> to vector<8x32xf32>
    %198 = vector.extract_strided_slice %196 {offsets = [0, 32], sizes = [8, 32], strides = [1, 1]} : vector<8x128xf32> to vector<8x32xf32>
    %199 = vector.extract_strided_slice %196 {offsets = [0, 64], sizes = [8, 32], strides = [1, 1]} : vector<8x128xf32> to vector<8x32xf32>
    %200 = vector.extract_strided_slice %196 {offsets = [0, 96], sizes = [8, 32], strides = [1, 1]} : vector<8x128xf32> to vector<8x32xf32>
    %201 = arith.mulf %198, %179 : vector<8x32xf32>
    %202 = arith.mulf %197, %199 : vector<8x32xf32>
    %203 = arith.addf %201, %202 : vector<8x32xf32>
    %204 = math.tanh %203 : vector<8x32xf32>
    %205 = arith.mulf %200, %204 : vector<8x32xf32>
    %206 = arith.index_cast %185 : i32 to index
    %c0_48 = arith.constant 0 : index
    %207 = vector.load %arg3[%206, %c0_48] : memref<64x32xf32, #tpu.memory_space<vmem>>, vector<8x32xf32>
    tpu.vector_store %arg3[%206, %c0_48], %205 {strides = array<i32>} : memref<64x32xf32, #tpu.memory_space<vmem>>, vector<8x32xf32>,
    %c8_i32_49 = arith.constant 8 : i32
    return
  }
}

</mosaic_0001>

<llo_original>
// kernel: tpu_custom_call.1
$region0: #{tpu_custom_call.1}
  #allocation0 [shape = 'u32[]', space=smem, size = 0x4, offset = 0x4, fixed_abs, tag = 'smem constant byte address 0x4 - core index']
  #allocation1 [shape = 'u32[144,128]{1,0:T(1,128)}', space=vmem, size = 0x12000, scoped, tag = 'internal scratch']
  #allocation2 [shape = 'f32[64,128]{1,0:T(8,128)}', space=vmem, size = 0x8000, scoped, tag = 'scratch operand']
  %s0 = inlined_call_operand.vmem [shape: f32[64,32], index: 0, kind: input, shape index: {}]
  %s1 = inlined_call_operand.vmem [shape: f32[72,128], index: 1, kind: input, shape index: {}]
  %s2 = inlined_call_operand.vmem [shape: f32[16,32], index: 2, kind: input, shape index: {}]
  %s3 = inlined_call_operand.vmem [shape: f32[64,32], index: 3, kind: output, shape index: {}]
  %s4 = sld [smem:[#allocation0]]
  $region22: #{tpu_custom_call.1} parent=0
    _
  %s6 = ssub.s32 1, %s4
  %s7 = scalar_select 0, %s6, %s4
  // Predicated region
  $region2: #{tpu_custom_call.1} parent=0 // pred_check
    _
  $region3: #{tpu_custom_call.1} parent=0 // pred_check_branch
    %9 = sbr.rel (0) target = $region5
  $region4: #{tpu_custom_call.1} parent=0 // pred_region
    _
  $region5: #{tpu_custom_call.1} parent=0 // pred_fallthru
    _
  // Predicated region
  $region6: #{tpu_custom_call.1} parent=0 // pred_check
    _
  $region7: #{tpu_custom_call.1} parent=0 // pred_check_branch
    %11 = sbr.rel (0) target = $region9
  $region8: #{tpu_custom_call.1} parent=0 // pred_region
    _
  $region9: #{tpu_custom_call.1} parent=0 // pred_fallthru
    _
  // Predicated region
  $region10: #{tpu_custom_call.1} parent=0 // pred_check
    _
  $region11: #{tpu_custom_call.1} parent=0 // pred_check_branch
    %13 = sbr.rel (0) target = $region13
  $region12: #{tpu_custom_call.1} parent=0 // pred_region
    _
  $region13: #{tpu_custom_call.1} parent=0 // pred_fallthru
    _
  %v14 = vld [vmem:[%s1] sm:$0xff]
  %v15 = vld [vmem:[%s1 + $0x8] sm:$0xff]
  %v16 = vld [vmem:[%s1 + $0x10] sm:$0xff]
  %v17 = vld [vmem:[%s1 + $0x18] sm:$0xff]
  %v18 = vld [vmem:[%s1 + $0x20] sm:$0xff]
  %v19 = vld [vmem:[%s1 + $0x28] sm:$0xff]
  %v20 = vld [vmem:[%s1 + $0x30] sm:$0xff]
  %v21 = vld [vmem:[%s1 + $0x38] sm:$0xff]
  %v22 = vld [vmem:[%s1 + $0x40] sm:$0x1]
  %v23 = vld [vmem:[%s2] sm:$0xff]
  %v24 = vld [vmem:[%s2 + $0x8] sm:$0xff]
  %v25 = vlaneseq
  %v26 = vand.u32 %v25, 127
  %vm27 = vcmp.ge.s32.totalorder %v26, 64
  %vm28 = vcmp.lt.s32.totalorder %v26, 96
  %vm29 = vmand %vm27, %vm28
  %v30 = vld [vmem:[%s0] sm:$0xff]
  %v31 = vld [vmem:[%s0 + $0x8] sm:$0xff]
  %v32 = vld [vmem:[%s0 + $0x10] sm:$0xff]
  %v33 = vld [vmem:[%s0 + $0x18] sm:$0xff]
  %v34 = vld [vmem:[%s0 + $0x20] sm:$0xff]
  %v35 = vld [vmem:[%s0 + $0x28] sm:$0xff]
  %v36 = vld [vmem:[%s0 + $0x30] sm:$0xff]
  %v37 = vld [vmem:[%s0 + $0x38] sm:$0xff]
  %v38 = vlaneseq
  %v39 = vshrl.u32 %v38, 7
  %v40 = vsub.s32 0, %v39
  %v41 = vrot.slane %v22, %v40
  %vm42 = vcmask 261120
  %v44 = vsel %vm42, %v30, 0
  %v47 = vsel %vm42, %v31, 0
  %v50 = vsel %vm42, %v32, 0
  %v53 = vsel %vm42, %v33, 0
  %v56 = vsel %vm42, %v34, 0
  %v59 = vsel %vm42, %v35, 0
  %v62 = vsel %vm42, %v36, 0
  %v65 = vsel %vm42, %v37, 0
  %67 = vmatprep.subr.mxu0 0.0
  %68 = vmatpush1.msra.mxu0 0.0
  %69 = vmatprep.subr.mxu0 0.0
  %70 = vmatpush1.msra.mxu0 0.0
  %71 = vmatprep.subr.mxu0 0.0
  %72 = vmatpush1.msra.mxu0 0.0
  %73 = vmatprep.subr.mxu0 0.0
  %74 = vmatpush1.msra.mxu0 0.0
  %75 = vmatprep.subr.mxu0 0.0
  %76 = vmatpush1.msra.mxu0 0.0
  %77 = vmatprep.subr.mxu0 0.0
  %78 = vmatpush1.msra.mxu0 0.0
  %79 = vmatprep.subr.mxu0 0.0
  %80 = vmatpush1.msra.mxu0 0.0
  %81 = vmatprep.subr.mxu0 0.0
  %82 = vmatpush1.msra.mxu0 0.0
  %83 = vmatprep.subr.mxu0 0.0
  %84 = vmatpush1.msra.mxu0 0.0
  %85 = vmatprep.subr.mxu0 0.0
  %86 = vmatpush1.msra.mxu0 0.0
  %87 = vmatprep.subr.mxu0 0.0
  %88 = vmatpush1.msra.mxu0 0.0
  %89 = vmatprep.subr.mxu0 0.0
  %90 = vmatpush1.msra.mxu0 0.0
  %91 = vmatprep.subr.mxu0 0.0
  %92 = vmatpush1.msra.mxu0 %v17
  %93 = vmatprep.subr.mxu0 0.0
  %94 = vmatpush1.msra.mxu0 %v16
  %95 = vmatprep.subr.mxu0 0.0
  %96 = vmatpush1.msra.mxu0 %v15
  %97 = vmatprep.subr.mxu0 0.0
  %98 = vmatpush1.msra.mxu0 %v14
  %99 = vmatprep.subr.mxu0 0.0
  %100 = vmatpush2.msra.mxu0 0.0
  %101 = vmatprep.subr.mxu0 0.0
  %102 = vmatpush2.msra.mxu0 0.0
  %103 = vmatprep.subr.mxu0 0.0
  %104 = vmatpush2.msra.mxu0 0.0
  %105 = vmatprep.subr.mxu0 0.0
  %106 = vmatpush2.msra.mxu0 0.0
  %107 = vmatprep.subr.mxu0 0.0
  %108 = vmatpush2.msra.mxu0 0.0
  %109 = vmatprep.subr.mxu0 0.0
  %110 = vmatpush2.msra.mxu0 0.0
  %111 = vmatprep.subr.mxu0 0.0
  %112 = vmatpush2.msra.mxu0 0.0
  %113 = vmatprep.subr.mxu0 0.0
  %114 = vmatpush2.msra.mxu0 0.0
  %115 = vmatprep.subr.mxu0 0.0
  %116 = vmatpush2.msra.mxu0 0.0
  %117 = vmatprep.subr.mxu0 0.0
  %118 = vmatpush2.msra.mxu0 0.0
  %119 = vmatprep.subr.mxu0 0.0
  %120 = vmatpush2.msra.mxu0 0.0
  %121 = vmatprep.subr.mxu0 0.0
  %122 = vmatpush2.msra.mxu0 0.0
  %123 = vmatprep.subr.mxu0 0.0
  %124 = vmatpush2.msra.mxu0 0.0
  %125 = vmatprep.subr.mxu0 0.0
  %126 = vmatpush2.msra.mxu0 0.0
  %127 = vmatprep.subr.mxu0 0.0
  %128 = vmatpush2.msra.mxu0 0.0
  %129 = vmatprep.subr.mxu0 0.0
  %130 = vmatpush2.msra.mxu0 0.0
  %131 = vmatprep.mubr.f32.mxu0 0.0
  %132 = vmatmul.mubr.f32.gmra.mxu0 %v44
  %v133 = vpop.f32.mrf.mxu0
  %v134 = vadd.f32 %v41, %v133
  %v135 = vpop.f32.mrf.mxu0
  %136 = vmatprep.mubr.f32.mxu0 0.0
  %137 = vmatmul.mubr.f32.gmra.mxu0 %v47
  %v138 = vpop.f32.mrf.mxu0
  %v139 = vadd.f32 %v41, %v138
  %v140 = vpop.f32.mrf.mxu0
  %141 = vmatprep.mubr.f32.mxu0 0.0
  %142 = vmatmul.mubr.f32.gmra.mxu0 %v50
  %v143 = vpop.f32.mrf.mxu0
  %v144 = vadd.f32 %v41, %v143
  %v145 = vpop.f32.mrf.mxu0
  %146 = vmatprep.mubr.f32.mxu0 0.0
  %147 = vmatmul.mubr.f32.gmra.mxu0 %v53
  %v148 = vpop.f32.mrf.mxu0
  %v149 = vadd.f32 %v41, %v148
  %v150 = vpop.f32.mrf.mxu0
  %151 = vmatprep.mubr.f32.mxu0 0.0
  %152 = vmatmul.mubr.f32.gmra.mxu0 %v56
  %v153 = vpop.f32.mrf.mxu0
  %v154 = vadd.f32 %v41, %v153
  %v155 = vpop.f32.mrf.mxu0
  %156 = vmatprep.mubr.f32.mxu0 0.0
  %157 = vmatmul.mubr.f32.gmra.mxu0 %v59
  %v158 = vpop.f32.mrf.mxu0
  %v159 = vadd.f32 %v41, %v158
  %v160 = vpop.f32.mrf.mxu0
  %161 = vmatprep.mubr.f32.mxu0 0.0
  %162 = vmatmul.mubr.f32.gmra.mxu0 %v62
  %v163 = vpop.f32.mrf.mxu0
  %v164 = vadd.f32 %v41, %v163
  %v165 = vpop.f32.mrf.mxu0
  %166 = vmatprep.mubr.f32.mxu0 0.0
  %167 = vmatmul.mubr.f32.gmra.mxu0 %v65
  %v168 = vpop.f32.mrf.mxu0
  %v169 = vadd.f32 %v41, %v168
  %v170 = vpop.f32.mrf.mxu0
  %171 = vdwg.mxu0
  %172 = vst [vmem:[#allocation2] sm:$0xff] %v134
  %173 = vst [vmem:[#allocation2 + $0x8] sm:$0xff] %v139
  %174 = vst [vmem:[#allocation2 + $0x10] sm:$0xff] %v144
  %175 = vst [vmem:[#allocation2 + $0x18] sm:$0xff] %v149
  %176 = vst [vmem:[#allocation2 + $0x20] sm:$0xff] %v154
  %177 = vst [vmem:[#allocation2 + $0x28] sm:$0xff] %v159
  %178 = vst [vmem:[#allocation2 + $0x30] sm:$0xff] %v164
  %179 = vst [vmem:[#allocation2 + $0x38] sm:$0xff] %v169
  %v180 = vld [vmem:[#allocation2] sm:$0xff]
  %v182 = vsel %vm42, %v23, 0
  %184 = vmatprep.subr.mxu0 0.0
  %185 = vmatpush1.msra.mxu0 0.0
  %186 = vmatprep.subr.mxu0 0.0
  %187 = vmatpush1.msra.mxu0 0.0
  %188 = vmatprep.subr.mxu0 0.0
  %189 = vmatpush1.msra.mxu0 0.0
  %190 = vmatprep.subr.mxu0 0.0
  %191 = vmatpush1.msra.mxu0 0.0
  %192 = vmatprep.subr.mxu0 0.0
  %193 = vmatpush1.msra.mxu0 0.0
  %194 = vmatprep.subr.mxu0 0.0
  %195 = vmatpush1.msra.mxu0 0.0
  %196 = vmatprep.subr.mxu0 0.0
  %197 = vmatpush1.msra.mxu0 0.0
  %198 = vmatprep.subr.mxu0 0.0
  %199 = vmatpush1.msra.mxu0 0.0
  %200 = vmatprep.subr.mxu0 0.0
  %201 = vmatpush1.msra.mxu0 0.0
  %202 = vmatprep.subr.mxu0 0.0
  %203 = vmatpush1.msra.mxu0 0.0
  %204 = vmatprep.subr.mxu0 0.0
  %205 = vmatpush1.msra.mxu0 0.0
  %206 = vmatprep.subr.mxu0 0.0
  %207 = vmatpush1.msra.mxu0 0.0
  %208 = vmatprep.subr.mxu0 0.0
  %209 = vmatpush1.msra.mxu0 %v21
  %210 = vmatprep.subr.mxu0 0.0
  %211 = vmatpush1.msra.mxu0 %v20
  %212 = vmatprep.subr.mxu0 0.0
  %213 = vmatpush1.msra.mxu0 %v19
  %214 = vmatprep.subr.mxu0 0.0
  %215 = vmatpush1.msra.mxu0 %v18
  %216 = vmatprep.subr.mxu0 0.0
  %217 = vmatpush2.msra.mxu0 0.0
  %218 = vmatprep.subr.mxu0 0.0
  %219 = vmatpush2.msra.mxu0 0.0
  %220 = vmatprep.subr.mxu0 0.0
  %221 = vmatpush2.msra.mxu0 0.0
  %222 = vmatprep.subr.mxu0 0.0
  %223 = vmatpush2.msra.mxu0 0.0
  %224 = vmatprep.subr.mxu0 0.0
  %225 = vmatpush2.msra.mxu0 0.0
  %226 = vmatprep.subr.mxu0 0.0
  %227 = vmatpush2.msra.mxu0 0.0
  %228 = vmatprep.subr.mxu0 0.0
  %229 = vmatpush2.msra.mxu0 0.0
  %230 = vmatprep.subr.mxu0 0.0
  %231 = vmatpush2.msra.mxu0 0.0
  %232 = vmatprep.subr.mxu0 0.0
  %233 = vmatpush2.msra.mxu0 0.0
  %234 = vmatprep.subr.mxu0 0.0
  %235 = vmatpush2.msra.mxu0 0.0
  %236 = vmatprep.subr.mxu0 0.0
  %237 = vmatpush2.msra.mxu0 0.0
  %238 = vmatprep.subr.mxu0 0.0
  %239 = vmatpush2.msra.mxu0 0.0
  %240 = vmatprep.subr.mxu0 0.0
  %241 = vmatpush2.msra.mxu0 0.0
  %242 = vmatprep.subr.mxu0 0.0
  %243 = vmatpush2.msra.mxu0 0.0
  %244 = vmatprep.subr.mxu0 0.0
  %245 = vmatpush2.msra.mxu0 0.0
  %246 = vmatprep.subr.mxu0 0.0
  %247 = vmatpush2.msra.mxu0 0.0
  %248 = vmatprep.mubr.f32.mxu0 0.0
  %249 = vmatmul.mubr.f32.gmra.mxu0 %v182
  %v250 = vpop.f32.mrf.mxu0
  %v251 = vadd.f32 0.0, %v250
  %v252 = vpop.f32.mrf.mxu0
  %253 = vdwg.mxu0
  %v254 = vadd.f32 %v180, %v251
  %v255 = vtanh.pop %v254
  %v256 = vxor.u32 %v254, 2147483648
  %v257 = vmul.f32 %v256, 1.442695
  %v258 = vpow.pop %v257
  %v259 = vadd.f32 %v258, 1.0
  %v260 = vrcp.pop %v259
  %v261 = vmul.f32 1.0, %v260
  %v262 = vsel %vm29, %v255, %v261
  %264 = vrot.lane.b32.xlu0 %v24, 32
  %v265 = vpop.permute.xlu0 %264
  %v267 = vmul.f32 %v262, %v265
  %269 = vrot.lane.b32.xlu0 %v262, 64
  %v270 = vpop.permute.xlu0 %269
  %v272 = vmul.f32 %v262, %v270
  %274 = vrot.lane.b32.xlu0 %v272, 32
  %v275 = vpop.permute.xlu0 %274
  %v277 = vadd.f32 %v267, %v275
  %v278 = vtanh.pop %v277
  %280 = vrot.lane.b32.xlu0 %v278, 64
  %v281 = vpop.permute.xlu0 %280
  %v283 = vmul.f32 %v262, %v281
  %285 = vrot.lane.b32.xlu0 %v283, 32
  %v286 = vpop.permute.xlu0 %285
  %288 = vst.msk [vmem:[%s3] sm:$0xff] %vm42, %v286
  %s289 = scalar_lea.vmem [#allocation2], 8
  %v290 = vld [vmem:[%s289] sm:$0xff]
  %v291 = vsel %vm42, %v286, 0
  %293 = vmatprep.subr.mxu0 0.0
  %294 = vmatpush1.msra.mxu0 0.0
  %295 = vmatprep.subr.mxu0 0.0
  %296 = vmatpush1.msra.mxu0 0.0
  %297 = vmatprep.subr.mxu0 0.0
  %298 = vmatpush1.msra.mxu0 0.0
  %299 = vmatprep.subr.mxu0 0.0
  %300 = vmatpush1.msra.mxu0 0.0
  %301 = vmatprep.subr.mxu0 0.0
  %302 = vmatpush1.msra.mxu0 0.0
  %303 = vmatprep.subr.mxu0 0.0
  %304 = vmatpush1.msra.mxu0 0.0
  %305 = vmatprep.subr.mxu0 0.0
  %306 = vmatpush1.msra.mxu0 0.0
  %307 = vmatprep.subr.mxu0 0.0
  %308 = vmatpush1.msra.mxu0 0.0
  %309 = vmatprep.subr.mxu0 0.0
  %310 = vmatpush1.msra.mxu0 0.0
  %311 = vmatprep.subr.mxu0 0.0
  %312 = vmatpush1.msra.mxu0 0.0
  %313 = vmatprep.subr.mxu0 0.0
  %314 = vmatpush1.msra.mxu0 0.0
  %315 = vmatprep.subr.mxu0 0.0
  %316 = vmatpush1.msra.mxu0 0.0
  %317 = vmatprep.subr.mxu0 0.0
  %318 = vmatpush1.msra.mxu0 %v21
  %319 = vmatprep.subr.mxu0 0.0
  %320 = vmatpush1.msra.mxu0 %v20
  %321 = vmatprep.subr.mxu0 0.0
  %322 = vmatpush1.msra.mxu0 %v19
  %323 = vmatprep.subr.mxu0 0.0
  %324 = vmatpush1.msra.mxu0 %v18
  %325 = vmatprep.subr.mxu0 0.0
  %326 = vmatpush2.msra.mxu0 0.0
  %327 = vmatprep.subr.mxu0 0.0
  %328 = vmatpush2.msra.mxu0 0.0
  %329 = vmatprep.subr.mxu0 0.0
  %330 = vmatpush2.msra.mxu0 0.0
  %331 = vmatprep.subr.mxu0 0.0
  %332 = vmatpush2.msra.mxu0 0.0
  %333 = vmatprep.subr.mxu0 0.0
  %334 = vmatpush2.msra.mxu0 0.0
  %335 = vmatprep.subr.mxu0 0.0
  %336 = vmatpush2.msra.mxu0 0.0
  %337 = vmatprep.subr.mxu0 0.0
  %338 = vmatpush2.msra.mxu0 0.0
  %339 = vmatprep.subr.mxu0 0.0
  %340 = vmatpush2.msra.mxu0 0.0
  %341 = vmatprep.subr.mxu0 0.0
  %342 = vmatpush2.msra.mxu0 0.0
  %343 = vmatprep.subr.mxu0 0.0
  %344 = vmatpush2.msra.mxu0 0.0
  %345 = vmatprep.subr.mxu0 0.0
  %346 = vmatpush2.msra.mxu0 0.0
  %347 = vmatprep.subr.mxu0 0.0
  %348 = vmatpush2.msra.mxu0 0.0
  %349 = vmatprep.subr.mxu0 0.0
  %350 = vmatpush2.msra.mxu0 0.0
  %351 = vmatprep.subr.mxu0 0.0
  %352 = vmatpush2.msra.mxu0 0.0
  %353 = vmatprep.subr.mxu0 0.0
  %354 = vmatpush2.msra.mxu0 0.0
  %355 = vmatprep.subr.mxu0 0.0
  %356 = vmatpush2.msra.mxu0 0.0
  %357 = vmatprep.mubr.f32.mxu0 0.0
  %358 = vmatmul.mubr.f32.gmra.mxu0 %v291
  %v359 = vpop.f32.mrf.mxu0
  %v360 = vadd.f32 0.0, %v359
  %v361 = vpop.f32.mrf.mxu0
  %362 = vdwg.mxu0
  %v363 = vadd.f32 %v290, %v360
  %v364 = vtanh.pop %v363
  %v365 = vxor.u32 %v363, 2147483648
  %v366 = vmul.f32 %v365, 1.442695
  %v367 = vpow.pop %v366
  %v368 = vadd.f32 %v367, 1.0
  %v369 = vrcp.pop %v368
  %v370 = vmul.f32 1.0, %v369
  %v371 = vsel %vm29, %v364, %v370
  %v372 = vmul.f32 %v371, %v277
  %374 = vrot.lane.b32.xlu0 %v371, 64
  %v375 = vpop.permute.xlu0 %374
  %v377 = vmul.f32 %v371, %v375
  %379 = vrot.lane.b32.xlu0 %v377, 32
  %v380 = vpop.permute.xlu0 %379
  %v382 = vadd.f32 %v372, %v380
  %v383 = vtanh.pop %v382
  %385 = vrot.lane.b32.xlu0 %v383, 64
  %v386 = vpop.permute.xlu0 %385
  %v388 = vmul.f32 %v371, %v386
  %390 = vrot.lane.b32.xlu0 %v388, 32
  %v391 = vpop.permute.xlu0 %390
  %s393 = scalar_lea.vmem %s3, 8
  %394 = vst.msk [vmem:[%s393] sm:$0xff] %vm42, %v391
  %s395 = scalar_lea.vmem [#allocation2], 16
  %v396 = vld [vmem:[%s395] sm:$0xff]
  %v397 = vsel %vm42, %v391, 0
  %399 = vmatprep.subr.mxu0 0.0
  %400 = vmatpush1.msra.mxu0 0.0
  %401 = vmatprep.subr.mxu0 0.0
  %402 = vmatpush1.msra.mxu0 0.0
  %403 = vmatprep.subr.mxu0 0.0
  %404 = vmatpush1.msra.mxu0 0.0
  %405 = vmatprep.subr.mxu0 0.0
  %406 = vmatpush1.msra.mxu0 0.0
  %407 = vmatprep.subr.mxu0 0.0
  %408 = vmatpush1.msra.mxu0 0.0
  %409 = vmatprep.subr.mxu0 0.0
  %410 = vmatpush1.msra.mxu0 0.0
  %411 = vmatprep.subr.mxu0 0.0
  %412 = vmatpush1.msra.mxu0 0.0
  %413 = vmatprep.subr.mxu0 0.0
  %414 = vmatpush1.msra.mxu0 0.0
  %415 = vmatprep.subr.mxu0 0.0
  %416 = vmatpush1.msra.mxu0 0.0
  %417 = vmatprep.subr.mxu0 0.0
  %418 = vmatpush1.msra.mxu0 0.0
  %419 = vmatprep.subr.mxu0 0.0
  %420 = vmatpush1.msra.mxu0 0.0
  %421 = vmatprep.subr.mxu0 0.0
  %422 = vmatpush1.msra.mxu0 0.0
  %423 = vmatprep.subr.mxu0 0.0
  %424 = vmatpush1.msra.mxu0 %v21
  %425 = vmatprep.subr.mxu0 0.0
  %426 = vmatpush1.msra.mxu0 %v20
  %427 = vmatprep.subr.mxu0 0.0
  %428 = vmatpush1.msra.mxu0 %v19
  %429 = vmatprep.subr.mxu0 0.0
  %430 = vmatpush1.msra.mxu0 %v18
  %431 = vmatprep.subr.mxu0 0.0
  %432 = vmatpush2.msra.mxu0 0.0
  %433 = vmatprep.subr.mxu0 0.0
  %434 = vmatpush2.msra.mxu0 0.0
  %435 = vmatprep.subr.mxu0 0.0
  %436 = vmatpush2.msra.mxu0 0.0
  %437 = vmatprep.subr.mxu0 0.0
  %438 = vmatpush2.msra.mxu0 0.0
  %439 = vmatprep.subr.mxu0 0.0
  %440 = vmatpush2.msra.mxu0 0.0
  %441 = vmatprep.subr.mxu0 0.0
  %442 = vmatpush2.msra.mxu0 0.0
  %443 = vmatprep.subr.mxu0 0.0
  %444 = vmatpush2.msra.mxu0 0.0
  %445 = vmatprep.subr.mxu0 0.0
  %446 = vmatpush2.msra.mxu0 0.0
  %447 = vmatprep.subr.mxu0 0.0
  %448 = vmatpush2.msra.mxu0 0.0
  %449 = vmatprep.subr.mxu0 0.0
  %450 = vmatpush2.msra.mxu0 0.0
  %451 = vmatprep.subr.mxu0 0.0
  %452 = vmatpush2.msra.mxu0 0.0
  %453 = vmatprep.subr.mxu0 0.0
  %454 = vmatpush2.msra.mxu0 0.0
  %455 = vmatprep.subr.mxu0 0.0
  %456 = vmatpush2.msra.mxu0 0.0
  %457 = vmatprep.subr.mxu0 0.0
  %458 = vmatpush2.msra.mxu0 0.0
  %459 = vmatprep.subr.mxu0 0.0
  %460 = vmatpush2.msra.mxu0 0.0
  %461 = vmatprep.subr.mxu0 0.0
  %462 = vmatpush2.msra.mxu0 0.0
  %463 = vmatprep.mubr.f32.mxu0 0.0
  %464 = vmatmul.mubr.f32.gmra.mxu0 %v397
  %v465 = vpop.f32.mrf.mxu0
  %v466 = vadd.f32 0.0, %v465
  %v467 = vpop.f32.mrf.mxu0
  %468 = vdwg.mxu0
  %v469 = vadd.f32 %v396, %v466
  %v470 = vtanh.pop %v469
  %v471 = vxor.u32 %v469, 2147483648
  %v472 = vmul.f32 %v471, 1.442695
  %v473 = vpow.pop %v472
  %v474 = vadd.f32 %v473, 1.0
  %v475 = vrcp.pop %v474
  %v476 = vmul.f32 1.0, %v475
  %v477 = vsel %vm29, %v470, %v476
  %v478 = vmul.f32 %v477, %v382
  %480 = vrot.lane.b32.xlu0 %v477, 64
  %v481 = vpop.permute.xlu0 %480
  %v483 = vmul.f32 %v477, %v481
  %485 = vrot.lane.b32.xlu0 %v483, 32
  %v486 = vpop.permute.xlu0 %485
  %v488 = vadd.f32 %v478, %v486
  %v489 = vtanh.pop %v488
  %491 = vrot.lane.b32.xlu0 %v489, 64
  %v492 = vpop.permute.xlu0 %491
  %v494 = vmul.f32 %v477, %v492
  %496 = vrot.lane.b32.xlu0 %v494, 32
  %v497 = vpop.permute.xlu0 %496
  %s499 = scalar_lea.vmem %s3, 16
  %500 = vst.msk [vmem:[%s499] sm:$0xff] %vm42, %v497
  %s501 = scalar_lea.vmem [#allocation2], 24
  %v502 = vld [vmem:[%s501] sm:$0xff]
  %v503 = vsel %vm42, %v497, 0
  %505 = vmatprep.subr.mxu0 0.0
  %506 = vmatpush1.msra.mxu0 0.0
  %507 = vmatprep.subr.mxu0 0.0
  %508 = vmatpush1.msra.mxu0 0.0
  %509 = vmatprep.subr.mxu0 0.0
  %510 = vmatpush1.msra.mxu0 0.0
  %511 = vmatprep.subr.mxu0 0.0
  %512 = vmatpush1.msra.mxu0 0.0
  %513 = vmatprep.subr.mxu0 0.0
  %514 = vmatpush1.msra.mxu0 0.0
  %515 = vmatprep.subr.mxu0 0.0
  %516 = vmatpush1.msra.mxu0 0.0
  %517 = vmatprep.subr.mxu0 0.0
  %518 = vmatpush1.msra.mxu0 0.0
  %519 = vmatprep.subr.mxu0 0.0
  %520 = vmatpush1.msra.mxu0 0.0
  %521 = vmatprep.subr.mxu0 0.0
  %522 = vmatpush1.msra.mxu0 0.0
  %523 = vmatprep.subr.mxu0 0.0
  %524 = vmatpush1.msra.mxu0 0.0
  %525 = vmatprep.subr.mxu0 0.0
  %526 = vmatpush1.msra.mxu0 0.0
  %527 = vmatprep.subr.mxu0 0.0
  %528 = vmatpush1.msra.mxu0 0.0
  %529 = vmatprep.subr.mxu0 0.0
  %530 = vmatpush1.msra.mxu0 %v21
  %531 = vmatprep.subr.mxu0 0.0
  %532 = vmatpush1.msra.mxu0 %v20
  %533 = vmatprep.subr.mxu0 0.0
  %534 = vmatpush1.msra.mxu0 %v19
  %535 = vmatprep.subr.mxu0 0.0
  %536 = vmatpush1.msra.mxu0 %v18
  %537 = vmatprep.subr.mxu0 0.0
  %538 = vmatpush2.msra.mxu0 0.0
  %539 = vmatprep.subr.mxu0 0.0
  %540 = vmatpush2.msra.mxu0 0.0
  %541 = vmatprep.subr.mxu0 0.0
  %542 = vmatpush2.msra.mxu0 0.0
  %543 = vmatprep.subr.mxu0 0.0
  %544 = vmatpush2.msra.mxu0 0.0
  %545 = vmatprep.subr.mxu0 0.0
  %546 = vmatpush2.msra.mxu0 0.0
  %547 = vmatprep.subr.mxu0 0.0
  %548 = vmatpush2.msra.mxu0 0.0
  %549 = vmatprep.subr.mxu0 0.0
  %550 = vmatpush2.msra.mxu0 0.0
  %551 = vmatprep.subr.mxu0 0.0
  %552 = vmatpush2.msra.mxu0 0.0
  %553 = vmatprep.subr.mxu0 0.0
  %554 = vmatpush2.msra.mxu0 0.0
  %555 = vmatprep.subr.mxu0 0.0
  %556 = vmatpush2.msra.mxu0 0.0
  %557 = vmatprep.subr.mxu0 0.0
  %558 = vmatpush2.msra.mxu0 0.0
  %559 = vmatprep.subr.mxu0 0.0
  %560 = vmatpush2.msra.mxu0 0.0
  %561 = vmatprep.subr.mxu0 0.0
  %562 = vmatpush2.msra.mxu0 0.0
  %563 = vmatprep.subr.mxu0 0.0
  %564 = vmatpush2.msra.mxu0 0.0
  %565 = vmatprep.subr.mxu0 0.0
  %566 = vmatpush2.msra.mxu0 0.0
  %567 = vmatprep.subr.mxu0 0.0
  %568 = vmatpush2.msra.mxu0 0.0
  %569 = vmatprep.mubr.f32.mxu0 0.0
  %570 = vmatmul.mubr.f32.gmra.mxu0 %v503
  %v571 = vpop.f32.mrf.mxu0
  %v572 = vadd.f32 0.0, %v571
  %v573 = vpop.f32.mrf.mxu0
  %574 = vdwg.mxu0
  %v575 = vadd.f32 %v502, %v572
  %v576 = vtanh.pop %v575
  %v577 = vxor.u32 %v575, 2147483648
  %v578 = vmul.f32 %v577, 1.442695
  %v579 = vpow.pop %v578
  %v580 = vadd.f32 %v579, 1.0
  %v581 = vrcp.pop %v580
  %v582 = vmul.f32 1.0, %v581
  %v583 = vsel %vm29, %v576, %v582
  %v584 = vmul.f32 %v583, %v488
  %586 = vrot.lane.b32.xlu0 %v583, 64
  %v587 = vpop.permute.xlu0 %586
  %v589 = vmul.f32 %v583, %v587
  %591 = vrot.lane.b32.xlu0 %v589, 32
  %v592 = vpop.permute.xlu0 %591
  %v594 = vadd.f32 %v584, %v592
  %v595 = vtanh.pop %v594
  %597 = vrot.lane.b32.xlu0 %v595, 64
  %v598 = vpop.permute.xlu0 %597
  %v600 = vmul.f32 %v583, %v598
  %602 = vrot.lane.b32.xlu0 %v600, 32
  %v603 = vpop.permute.xlu0 %602
  %s605 = scalar_lea.vmem %s3, 24
  %606 = vst.msk [vmem:[%s605] sm:$0xff] %vm42, %v603
  %s607 = scalar_lea.vmem [#allocation2], 32
  %v608 = vld [vmem:[%s607] sm:$0xff]
  %v609 = vsel %vm42, %v603, 0
  %611 = vmatprep.subr.mxu0 0.0
  %612 = vmatpush1.msra.mxu0 0.0
  %613 = vmatprep.subr.mxu0 0.0
  %614 = vmatpush1.msra.mxu0 0.0
  %615 = vmatprep.subr.mxu0 0.0
  %616 = vmatpush1.msra.mxu0 0.0
  %617 = vmatprep.subr.mxu0 0.0
  %618 = vmatpush1.msra.mxu0 0.0
  %619 = vmatprep.subr.mxu0 0.0
  %620 = vmatpush1.msra.mxu0 0.0
  %621 = vmatprep.subr.mxu0 0.0
  %622 = vmatpush1.msra.mxu0 0.0
  %623 = vmatprep.subr.mxu0 0.0
  %624 = vmatpush1.msra.mxu0 0.0
  %625 = vmatprep.subr.mxu0 0.0
  %626 = vmatpush1.msra.mxu0 0.0
  %627 = vmatprep.subr.mxu0 0.0
  %628 = vmatpush1.msra.mxu0 0.0
  %629 = vmatprep.subr.mxu0 0.0
  %630 = vmatpush1.msra.mxu0 0.0
  %631 = vmatprep.subr.mxu0 0.0
  %632 = vmatpush1.msra.mxu0 0.0
  %633 = vmatprep.subr.mxu0 0.0
  %634 = vmatpush1.msra.mxu0 0.0
  %635 = vmatprep.subr.mxu0 0.0
  %636 = vmatpush1.msra.mxu0 %v21
  %637 = vmatprep.subr.mxu0 0.0
  %638 = vmatpush1.msra.mxu0 %v20
  %639 = vmatprep.subr.mxu0 0.0
  %640 = vmatpush1.msra.mxu0 %v19
  %641 = vmatprep.subr.mxu0 0.0
  %642 = vmatpush1.msra.mxu0 %v18
  %643 = vmatprep.subr.mxu0 0.0
  %644 = vmatpush2.msra.mxu0 0.0
  %645 = vmatprep.subr.mxu0 0.0
  %646 = vmatpush2.msra.mxu0 0.0
  %647 = vmatprep.subr.mxu0 0.0
  %648 = vmatpush2.msra.mxu0 0.0
  %649 = vmatprep.subr.mxu0 0.0
  %650 = vmatpush2.msra.mxu0 0.0
  %651 = vmatprep.subr.mxu0 0.0
  %652 = vmatpush2.msra.mxu0 0.0
  %653 = vmatprep.subr.mxu0 0.0
  %654 = vmatpush2.msra.mxu0 0.0
  %655 = vmatprep.subr.mxu0 0.0
  %656 = vmatpush2.msra.mxu0 0.0
  %657 = vmatprep.subr.mxu0 0.0
  %658 = vmatpush2.msra.mxu0 0.0
  %659 = vmatprep.subr.mxu0 0.0
  %660 = vmatpush2.msra.mxu0 0.0
  %661 = vmatprep.subr.mxu0 0.0
  %662 = vmatpush2.msra.mxu0 0.0
  %663 = vmatprep.subr.mxu0 0.0
  %664 = vmatpush2.msra.mxu0 0.0
  %665 = vmatprep.subr.mxu0 0.0
  %666 = vmatpush2.msra.mxu0 0.0
  %667 = vmatprep.subr.mxu0 0.0
  %668 = vmatpush2.msra.mxu0 0.0
  %669 = vmatprep.subr.mxu0 0.0
  %670 = vmatpush2.msra.mxu0 0.0
  %671 = vmatprep.subr.mxu0 0.0
  %672 = vmatpush2.msra.mxu0 0.0
  %673 = vmatprep.subr.mxu0 0.0
  %674 = vmatpush2.msra.mxu0 0.0
  %675 = vmatprep.mubr.f32.mxu0 0.0
  %676 = vmatmul.mubr.f32.gmra.mxu0 %v609
  %v677 = vpop.f32.mrf.mxu0
  %v678 = vadd.f32 0.0, %v677
  %v679 = vpop.f32.mrf.mxu0
  %680 = vdwg.mxu0
  %v681 = vadd.f32 %v608, %v678
  %v682 = vtanh.pop %v681
  %v683 = vxor.u32 %v681, 2147483648
  %v684 = vmul.f32 %v683, 1.442695
  %v685 = vpow.pop %v684
  %v686 = vadd.f32 %v685, 1.0
  %v687 = vrcp.pop %v686
  %v688 = vmul.f32 1.0, %v687
  %v689 = vsel %vm29, %v682, %v688
  %v690 = vmul.f32 %v689, %v594
  %692 = vrot.lane.b32.xlu0 %v689, 64
  %v693 = vpop.permute.xlu0 %692
  %v695 = vmul.f32 %v689, %v693
  %697 = vrot.lane.b32.xlu0 %v695, 32
  %v698 = vpop.permute.xlu0 %697
  %v700 = vadd.f32 %v690, %v698
  %v701 = vtanh.pop %v700
  %703 = vrot.lane.b32.xlu0 %v701, 64
  %v704 = vpop.permute.xlu0 %703
  %v706 = vmul.f32 %v689, %v704
  %708 = vrot.lane.b32.xlu0 %v706, 32
  %v709 = vpop.permute.xlu0 %708
  %s711 = scalar_lea.vmem %s3, 32
  %712 = vst.msk [vmem:[%s711] sm:$0xff] %vm42, %v709
  %s713 = scalar_lea.vmem [#allocation2], 40
  %v714 = vld [vmem:[%s713] sm:$0xff]
  %v715 = vsel %vm42, %v709, 0
  %717 = vmatprep.subr.mxu0 0.0
  %718 = vmatpush1.msra.mxu0 0.0
  %719 = vmatprep.subr.mxu0 0.0
  %720 = vmatpush1.msra.mxu0 0.0
  %721 = vmatprep.subr.mxu0 0.0
  %722 = vmatpush1.msra.mxu0 0.0
  %723 = vmatprep.subr.mxu0 0.0
  %724 = vmatpush1.msra.mxu0 0.0
  %725 = vmatprep.subr.mxu0 0.0
  %726 = vmatpush1.msra.mxu0 0.0
  %727 = vmatprep.subr.mxu0 0.0
  %728 = vmatpush1.msra.mxu0 0.0
  %729 = vmatprep.subr.mxu0 0.0
  %730 = vmatpush1.msra.mxu0 0.0
  %731 = vmatprep.subr.mxu0 0.0
  %732 = vmatpush1.msra.mxu0 0.0
  %733 = vmatprep.subr.mxu0 0.0
  %734 = vmatpush1.msra.mxu0 0.0
  %735 = vmatprep.subr.mxu0 0.0
  %736 = vmatpush1.msra.mxu0 0.0
  %737 = vmatprep.subr.mxu0 0.0
  %738 = vmatpush1.msra.mxu0 0.0
  %739 = vmatprep.subr.mxu0 0.0
  %740 = vmatpush1.msra.mxu0 0.0
  %741 = vmatprep.subr.mxu0 0.0
  %742 = vmatpush1.msra.mxu0 %v21
  %743 = vmatprep.subr.mxu0 0.0
  %744 = vmatpush1.msra.mxu0 %v20
  %745 = vmatprep.subr.mxu0 0.0
  %746 = vmatpush1.msra.mxu0 %v19
  %747 = vmatprep.subr.mxu0 0.0
  %748 = vmatpush1.msra.mxu0 %v18
  %749 = vmatprep.subr.mxu0 0.0
  %750 = vmatpush2.msra.mxu0 0.0
  %751 = vmatprep.subr.mxu0 0.0
  %752 = vmatpush2.msra.mxu0 0.0
  %753 = vmatprep.subr.mxu0 0.0
  %754 = vmatpush2.msra.mxu0 0.0
  %755 = vmatprep.subr.mxu0 0.0
  %756 = vmatpush2.msra.mxu0 0.0
  %757 = vmatprep.subr.mxu0 0.0
  %758 = vmatpush2.msra.mxu0 0.0
  %759 = vmatprep.subr.mxu0 0.0
  %760 = vmatpush2.msra.mxu0 0.0
  %761 = vmatprep.subr.mxu0 0.0
  %762 = vmatpush2.msra.mxu0 0.0
  %763 = vmatprep.subr.mxu0 0.0
  %764 = vmatpush2.msra.mxu0 0.0
  %765 = vmatprep.subr.mxu0 0.0
  %766 = vmatpush2.msra.mxu0 0.0
  %767 = vmatprep.subr.mxu0 0.0
  %768 = vmatpush2.msra.mxu0 0.0
  %769 = vmatprep.subr.mxu0 0.0
  %770 = vmatpush2.msra.mxu0 0.0
  %771 = vmatprep.subr.mxu0 0.0
  %772 = vmatpush2.msra.mxu0 0.0
  %773 = vmatprep.subr.mxu0 0.0
  %774 = vmatpush2.msra.mxu0 0.0
  %775 = vmatprep.subr.mxu0 0.0
  %776 = vmatpush2.msra.mxu0 0.0
  %777 = vmatprep.subr.mxu0 0.0
  %778 = vmatpush2.msra.mxu0 0.0
  %779 = vmatprep.subr.mxu0 0.0
  %780 = vmatpush2.msra.mxu0 0.0
  %781 = vmatprep.mubr.f32.mxu0 0.0
  %782 = vmatmul.mubr.f32.gmra.mxu0 %v715
  %v783 = vpop.f32.mrf.mxu0
  %v784 = vadd.f32 0.0, %v783
  %v785 = vpop.f32.mrf.mxu0
  %786 = vdwg.mxu0
  %v787 = vadd.f32 %v714, %v784
  %v788 = vtanh.pop %v787
  %v789 = vxor.u32 %v787, 2147483648
  %v790 = vmul.f32 %v789, 1.442695
  %v791 = vpow.pop %v790
  %v792 = vadd.f32 %v791, 1.0
  %v793 = vrcp.pop %v792
  %v794 = vmul.f32 1.0, %v793
  %v795 = vsel %vm29, %v788, %v794
  %v796 = vmul.f32 %v795, %v700
  %798 = vrot.lane.b32.xlu0 %v795, 64
  %v799 = vpop.permute.xlu0 %798
  %v801 = vmul.f32 %v795, %v799
  %803 = vrot.lane.b32.xlu0 %v801, 32
  %v804 = vpop.permute.xlu0 %803
  %v806 = vadd.f32 %v796, %v804
  %v807 = vtanh.pop %v806
  %809 = vrot.lane.b32.xlu0 %v807, 64
  %v810 = vpop.permute.xlu0 %809
  %v812 = vmul.f32 %v795, %v810
  %814 = vrot.lane.b32.xlu0 %v812, 32
  %v815 = vpop.permute.xlu0 %814
  %s817 = scalar_lea.vmem %s3, 40
  %818 = vst.msk [vmem:[%s817] sm:$0xff] %vm42, %v815
  %s819 = scalar_lea.vmem [#allocation2], 48
  %v820 = vld [vmem:[%s819] sm:$0xff]
  %v821 = vsel %vm42, %v815, 0
  %823 = vmatprep.subr.mxu0 0.0
  %824 = vmatpush1.msra.mxu0 0.0
  %825 = vmatprep.subr.mxu0 0.0
  %826 = vmatpush1.msra.mxu0 0.0
  %827 = vmatprep.subr.mxu0 0.0
  %828 = vmatpush1.msra.mxu0 0.0
  %829 = vmatprep.subr.mxu0 0.0
  %830 = vmatpush1.msra.mxu0 0.0
  %831 = vmatprep.subr.mxu0 0.0
  %832 = vmatpush1.msra.mxu0 0.0
  %833 = vmatprep.subr.mxu0 0.0
  %834 = vmatpush1.msra.mxu0 0.0
  %835 = vmatprep.subr.mxu0 0.0
  %836 = vmatpush1.msra.mxu0 0.0
  %837 = vmatprep.subr.mxu0 0.0
  %838 = vmatpush1.msra.mxu0 0.0
  %839 = vmatprep.subr.mxu0 0.0
  %840 = vmatpush1.msra.mxu0 0.0
  %841 = vmatprep.subr.mxu0 0.0
  %842 = vmatpush1.msra.mxu0 0.0
  %843 = vmatprep.subr.mxu0 0.0
  %844 = vmatpush1.msra.mxu0 0.0
  %845 = vmatprep.subr.mxu0 0.0
  %846 = vmatpush1.msra.mxu0 0.0
  %847 = vmatprep.subr.mxu0 0.0
  %848 = vmatpush1.msra.mxu0 %v21
  %849 = vmatprep.subr.mxu0 0.0
  %850 = vmatpush1.msra.mxu0 %v20
  %851 = vmatprep.subr.mxu0 0.0
  %852 = vmatpush1.msra.mxu0 %v19
  %853 = vmatprep.subr.mxu0 0.0
  %854 = vmatpush1.msra.mxu0 %v18
  %855 = vmatprep.subr.mxu0 0.0
  %856 = vmatpush2.msra.mxu0 0.0
  %857 = vmatprep.subr.mxu0 0.0
  %858 = vmatpush2.msra.mxu0 0.0
  %859 = vmatprep.subr.mxu0 0.0
  %860 = vmatpush2.msra.mxu0 0.0
  %861 = vmatprep.subr.mxu0 0.0
  %862 = vmatpush2.msra.mxu0 0.0
  %863 = vmatprep.subr.mxu0 0.0
  %864 = vmatpush2.msra.mxu0 0.0
  %865 = vmatprep.subr.mxu0 0.0
  %866 = vmatpush2.msra.mxu0 0.0
  %867 = vmatprep.subr.mxu0 0.0
  %868 = vmatpush2.msra.mxu0 0.0
  %869 = vmatprep.subr.mxu0 0.0
  %870 = vmatpush2.msra.mxu0 0.0
  %871 = vmatprep.subr.mxu0 0.0
  %872 = vmatpush2.msra.mxu0 0.0
  %873 = vmatprep.subr.mxu0 0.0
  %874 = vmatpush2.msra.mxu0 0.0
  %875 = vmatprep.subr.mxu0 0.0
  %876 = vmatpush2.msra.mxu0 0.0
  %877 = vmatprep.subr.mxu0 0.0
  %878 = vmatpush2.msra.mxu0 0.0
  %879 = vmatprep.subr.mxu0 0.0
  %880 = vmatpush2.msra.mxu0 0.0
  %881 = vmatprep.subr.mxu0 0.0
  %882 = vmatpush2.msra.mxu0 0.0
  %883 = vmatprep.subr.mxu0 0.0
  %884 = vmatpush2.msra.mxu0 0.0
  %885 = vmatprep.subr.mxu0 0.0
  %886 = vmatpush2.msra.mxu0 0.0
  %887 = vmatprep.mubr.f32.mxu0 0.0
  %888 = vmatmul.mubr.f32.gmra.mxu0 %v821
  %v889 = vpop.f32.mrf.mxu0
  %v890 = vadd.f32 0.0, %v889
  %v891 = vpop.f32.mrf.mxu0
  %892 = vdwg.mxu0
  %v893 = vadd.f32 %v820, %v890
  %v894 = vtanh.pop %v893
  %v895 = vxor.u32 %v893, 2147483648
  %v896 = vmul.f32 %v895, 1.442695
  %v897 = vpow.pop %v896
  %v898 = vadd.f32 %v897, 1.0
  %v899 = vrcp.pop %v898
  %v900 = vmul.f32 1.0, %v899
  %v901 = vsel %vm29, %v894, %v900
  %v902 = vmul.f32 %v901, %v806
  %904 = vrot.lane.b32.xlu0 %v901, 64
  %v905 = vpop.permute.xlu0 %904
  %v907 = vmul.f32 %v901, %v905
  %909 = vrot.lane.b32.xlu0 %v907, 32
  %v910 = vpop.permute.xlu0 %909
  %v912 = vadd.f32 %v902, %v910
  %v913 = vtanh.pop %v912
  %915 = vrot.lane.b32.xlu0 %v913, 64
  %v916 = vpop.permute.xlu0 %915
  %v918 = vmul.f32 %v901, %v916
  %920 = vrot.lane.b32.xlu0 %v918, 32
  %v921 = vpop.permute.xlu0 %920
  %s923 = scalar_lea.vmem %s3, 48
  %924 = vst.msk [vmem:[%s923] sm:$0xff] %vm42, %v921
  %s925 = scalar_lea.vmem [#allocation2], 56
  %v926 = vld [vmem:[%s925] sm:$0xff]
  %v927 = vsel %vm42, %v921, 0
  %929 = vmatprep.subr.mxu0 0.0
  %930 = vmatpush1.msra.mxu0 0.0
  %931 = vmatprep.subr.mxu0 0.0
  %932 = vmatpush1.msra.mxu0 0.0
  %933 = vmatprep.subr.mxu0 0.0
  %934 = vmatpush1.msra.mxu0 0.0
  %935 = vmatprep.subr.mxu0 0.0
  %936 = vmatpush1.msra.mxu0 0.0
  %937 = vmatprep.subr.mxu0 0.0
  %938 = vmatpush1.msra.mxu0 0.0
  %939 = vmatprep.subr.mxu0 0.0
  %940 = vmatpush1.msra.mxu0 0.0
  %941 = vmatprep.subr.mxu0 0.0
  %942 = vmatpush1.msra.mxu0 0.0
  %943 = vmatprep.subr.mxu0 0.0
  %944 = vmatpush1.msra.mxu0 0.0
  %945 = vmatprep.subr.mxu0 0.0
  %946 = vmatpush1.msra.mxu0 0.0
  %947 = vmatprep.subr.mxu0 0.0
  %948 = vmatpush1.msra.mxu0 0.0
  %949 = vmatprep.subr.mxu0 0.0
  %950 = vmatpush1.msra.mxu0 0.0
  %951 = vmatprep.subr.mxu0 0.0
  %952 = vmatpush1.msra.mxu0 0.0
  %953 = vmatprep.subr.mxu0 0.0
  %954 = vmatpush1.msra.mxu0 %v21
  %955 = vmatprep.subr.mxu0 0.0
  %956 = vmatpush1.msra.mxu0 %v20
  %957 = vmatprep.subr.mxu0 0.0
  %958 = vmatpush1.msra.mxu0 %v19
  %959 = vmatprep.subr.mxu0 0.0
  %960 = vmatpush1.msra.mxu0 %v18
  %961 = vmatprep.subr.mxu0 0.0
  %962 = vmatpush2.msra.mxu0 0.0
  %963 = vmatprep.subr.mxu0 0.0
  %964 = vmatpush2.msra.mxu0 0.0
  %965 = vmatprep.subr.mxu0 0.0
  %966 = vmatpush2.msra.mxu0 0.0
  %967 = vmatprep.subr.mxu0 0.0
  %968 = vmatpush2.msra.mxu0 0.0
  %969 = vmatprep.subr.mxu0 0.0
  %970 = vmatpush2.msra.mxu0 0.0
  %971 = vmatprep.subr.mxu0 0.0
  %972 = vmatpush2.msra.mxu0 0.0
  %973 = vmatprep.subr.mxu0 0.0
  %974 = vmatpush2.msra.mxu0 0.0
  %975 = vmatprep.subr.mxu0 0.0
  %976 = vmatpush2.msra.mxu0 0.0
  %977 = vmatprep.subr.mxu0 0.0
  %978 = vmatpush2.msra.mxu0 0.0
  %979 = vmatprep.subr.mxu0 0.0
  %980 = vmatpush2.msra.mxu0 0.0
  %981 = vmatprep.subr.mxu0 0.0
  %982 = vmatpush2.msra.mxu0 0.0
  %983 = vmatprep.subr.mxu0 0.0
  %984 = vmatpush2.msra.mxu0 0.0
  %985 = vmatprep.subr.mxu0 0.0
  %986 = vmatpush2.msra.mxu0 0.0
  %987 = vmatprep.subr.mxu0 0.0
  %988 = vmatpush2.msra.mxu0 0.0
  %989 = vmatprep.subr.mxu0 0.0
  %990 = vmatpush2.msra.mxu0 0.0
  %991 = vmatprep.subr.mxu0 0.0
  %992 = vmatpush2.msra.mxu0 0.0
  %993 = vmatprep.mubr.f32.mxu0 0.0
  %994 = vmatmul.mubr.f32.gmra.mxu0 %v927
  %v995 = vpop.f32.mrf.mxu0
  %v996 = vadd.f32 0.0, %v995
  %v997 = vpop.f32.mrf.mxu0
  %998 = vdwg.mxu0
  %v999 = vadd.f32 %v926, %v996
  %v1000 = vtanh.pop %v999
  %v1001 = vxor.u32 %v999, 2147483648
  %v1002 = vmul.f32 %v1001, 1.442695
  %v1003 = vpow.pop %v1002
  %v1004 = vadd.f32 %v1003, 1.0
  %v1005 = vrcp.pop %v1004
  %v1006 = vmul.f32 1.0, %v1005
  %v1007 = vsel %vm29, %v1000, %v1006
  %v1008 = vmul.f32 %v1007, %v912
  %1010 = vrot.lane.b32.xlu0 %v1007, 64
  %v1011 = vpop.permute.xlu0 %1010
  %v1013 = vmul.f32 %v1007, %v1011
  %1015 = vrot.lane.b32.xlu0 %v1013, 32
  %v1016 = vpop.permute.xlu0 %1015
  %v1018 = vadd.f32 %v1008, %v1016
  %v1019 = vtanh.pop %v1018
  %1021 = vrot.lane.b32.xlu0 %v1019, 64
  %v1022 = vpop.permute.xlu0 %1021
  %v1024 = vmul.f32 %v1007, %v1022
  %1026 = vrot.lane.b32.xlu0 %v1024, 32
  %v1027 = vpop.permute.xlu0 %1026
  %s1029 = scalar_lea.vmem %s3, 56
  %1030 = vst.msk [vmem:[%s1029] sm:$0xff] %vm42, %v1027
  // Predicated region
  $region14: #{tpu_custom_call.1} parent=0 // pred_check
    _
  $region15: #{tpu_custom_call.1} parent=0 // pred_check_branch
    %1032 = sbr.rel (0) target = $region17
  $region16: #{tpu_custom_call.1} parent=0 // pred_region
    _
  $region17: #{tpu_custom_call.1} parent=0 // pred_fallthru
    _
  // Predicated region
  $region18: #{tpu_custom_call.1} parent=0 // pred_check
    _
  $region19: #{tpu_custom_call.1} parent=0 // pred_check_branch
    %1034 = sbr.rel (0) target = $region21
  $region20: #{tpu_custom_call.1} parent=0 // pred_region
    _
  $region21: #{tpu_custom_call.1} parent=0 // pred_fallthru
    _

</llo_original>
